<compile_context>
chip_gen: v7x
topology: tpu7x:2x2x1
jax: 0.10.0
libtpu: 0.0.40
codegen_flags: <defaults>
</compile_context>

<pallas_src>
import functools

import jax
import jax.numpy as jnp
from jax.experimental import pallas as pl
from jax.experimental.pallas import tpu as pltpu

HIDDEN = 150          # true hidden width of the MLP
HIDDEN_PAD = 256      # lane-aligned padded width (multiple of 128)


def _has_bf16_vector_units():
    """bf16 VPU/EUP exists on v6e/v7x; v5e (and older) lower bf16 elementwise to
    f32 with extra converts, so keep those chips on the f32 path."""
    try:
        kind = jax.devices()[0].device_kind.lower()
    except Exception:
        return True
    return not any(tag in kind for tag in ("v2", "v3", "v4", "v5"))


_BF16_ELEMENTWISE_DEFAULT = _has_bf16_vector_units()


def _mlp_kernel(x_ref, w1_ref, b1_ref, w2_ref, b2_ref, w3_ref, b3_ref, o_ref,
                *, bf16_elementwise):
    """Fused 3x (Linear + Tanh) over one batch tile; everything lives in VMEM.

    Matmuls take bf16 operands (MXU bf16 rate) and accumulate in f32.  Bias add
    is f32; tanh runs in bf16 on v6e/v7x (bf16 EUP, ~2x rate, merges the cast
    that feeds the next matmul) or f32 on v5e.
    """
    def layer(h_bf16, w_ref, b_ref):
        acc = jnp.dot(h_bf16, w_ref[...],
                      preferred_element_type=jnp.float32) + b_ref[...]
        if bf16_elementwise:
            return jnp.tanh(acc.astype(jnp.bfloat16))   # bf16 EUP; feeds next dot as-is
        return jnp.tanh(acc)                            # f32 EUP path (v5e)

    x = x_ref[...].astype(jnp.bfloat16)                 # in-kernel cast (free VPU op)
    h1 = layer(x, w1_ref, b1_ref)
    h2 = layer(h1.astype(jnp.bfloat16), w2_ref, b2_ref)
    h3 = layer(h2.astype(jnp.bfloat16), w3_ref, b3_ref)
    # Store only the columns the output actually has (150 by default, 256 if
    # return_padded); the tail store is lane-masked, no extra HBM pass needed.
    o_ref[...] = h3[:, : o_ref.shape[-1]].astype(o_ref.dtype)


def _choose_tile(B, tile_m):
    """Batch tile: full-array block for small B; otherwise a multiple-of-8 tile
    that (a) amortizes the ~0.35us/step grid overhead and (b) yields >= 2 grid
    steps so v7x's two TensorCores both get work."""
    tile_m = max(8, (tile_m // 8) * 8)
    if B <= min(256, tile_m):
        return B
    half = -(-B // 2)                 # cdiv(B, 2)
    half = ((half + 7) // 8) * 8      # round up to a multiple of 8
    return min(tile_m, half)


@functools.partial(
    jax.jit,
    static_argnames=("tile_m", "return_padded", "bf16_elementwise", "out_dtype"))
def _forward(x, params, *, tile_m, return_padded, bf16_elementwise, out_dtype):
    B, in_f = x.shape
    w1, b1 = params["w1"], params["b1"]
    w2, b2 = params["w2"], params["b2"]
    w3, b3 = params["w3"], params["b3"]

    tile = _choose_tile(B, tile_m)
    grid = (pl.cdiv(B, tile),)

    out_cols = HIDDEN_PAD if return_padded else HIDDEN
    out_bytes = jnp.dtype(out_dtype).itemsize

    full = lambda i: (0, 0)  # whole-array blocks: weights/biases resident in VMEM

    # Advisory cost for XLA's scheduler (reflects the reduced HBM traffic:
    # f32 x in, bf16 weights, out_cols * out_dtype out, no post-kernel slice).
    weight_bytes = (in_f * HIDDEN_PAD + 2 * HIDDEN_PAD * HIDDEN_PAD) * 2 \
        + 3 * HIDDEN_PAD * 4
    cost = pl.CostEstimate(
        flops=2 * B * (in_f + 2 * HIDDEN_PAD) * HIDDEN_PAD,
        transcendentals=3 * B * HIDDEN_PAD,
        bytes_accessed=weight_bytes + B * in_f * 4 + B * out_cols * out_bytes,
    )

    kernel = functools.partial(_mlp_kernel, bf16_elementwise=bf16_elementwise)

    # VMEM footprint is tiny even at tile=1024 (<3 MiB incl. double buffering +
    # ~0.4 MiB resident weights), so the default scoped-VMEM limit is fine on
    # every generation; raise vmem_limit_bytes only if tile_m is pushed >> 1024.
    out = pl.pallas_call(
        kernel,
        out_shape=jax.ShapeDtypeStruct((B, out_cols), out_dtype),
        grid_spec=pltpu.PrefetchScalarGridSpec(
            num_scalar_prefetch=0,
            grid=grid,
            in_specs=[
                pl.BlockSpec((tile, in_f), lambda i: (i, 0)),      # x tile (f32)
                pl.BlockSpec((in_f, HIDDEN_PAD), full),            # w1 (bf16)
                pl.BlockSpec((1, HIDDEN_PAD), full),               # b1 (f32)
                pl.BlockSpec((HIDDEN_PAD, HIDDEN_PAD), full),      # w2 (bf16)
                pl.BlockSpec((1, HIDDEN_PAD), full),               # b2 (f32)
                pl.BlockSpec((HIDDEN_PAD, HIDDEN_PAD), full),      # w3 (bf16)
                pl.BlockSpec((1, HIDDEN_PAD), full),               # b3 (f32)
            ],
            out_specs=pl.BlockSpec((tile, out_cols), lambda i: (i, 0)),
        ),
        compiler_params=pltpu.CompilerParams(
            dimension_semantics=("parallel",),   # shards batch grid across TCs on v7x
        ),
        cost_estimate=cost,
    )(x, w1, b1, w2, b2, w3, b3)

    # Empty policy_net / value_net => identity on shared_out.
    return out, out


def mlp_extractor_forward(x, params, *, tile_m=512, return_padded=False,
                          bf16_elementwise=None, out_dtype=None):
    """Runs the shared_net inside a single fused Pallas kernel.

    Args:
      x: (B, in_features) float32.
      params: dict from init_params (padded, bf16 weights / f32 biases).
      tile_m: max batch tile (multiple of 8).  512 is a good default on
        v5e/v6e/v7x; per-step overhead is amortized and VMEM use stays tiny.
      return_padded: if True, outputs are the lane-dense (B, 256) slab
        (consumers ignore cols 150..255); otherwise (B, 150).
      bf16_elementwise: run tanh in bf16 (v6e/v7x).  None => auto-detect.
      out_dtype: output dtype.  None => bf16 when bf16_elementwise else f32.
    Returns:
      (policy_out, value_out) — both equal shared_out (empty policy/value nets).
    """
    if bf16_elementwise is None:
        bf16_elementwise = _BF16_ELEMENTWISE_DEFAULT
    if out_dtype is None:
        out_dtype = jnp.bfloat16 if bf16_elementwise else jnp.float32
    return _forward(x, params, tile_m=int(tile_m), return_padded=bool(return_padded),
                    bf16_elementwise=bool(bf16_elementwise),
                    out_dtype=jnp.dtype(out_dtype).type)


def init_params(key, in_features):
    """Deterministic init matching nn.Linear's U(-1/sqrt(fan_in), 1/sqrt(fan_in)),
    zero-padded from HIDDEN=150 to HIDDEN_PAD=256.  Weights stored transposed vs
    PyTorch ((fan_in, fan_out)) as bf16 (MXU-native); biases (1, fan_out) f32."""
    keys = jax.random.split(key, 6)

    def linear(kw, kb, fan_in, fan_out):
        bound = 1.0 / jnp.sqrt(jnp.float32(fan_in))
        w = jax.random.uniform(kw, (fan_in, fan_out), jnp.float32, -bound, bound)
        b = jax.random.uniform(kb, (1, fan_out), jnp.float32, -bound, bound)
        return w, b

    w1, b1 = linear(keys[0], keys[1], in_features, HIDDEN)
    w2, b2 = linear(keys[2], keys[3], HIDDEN, HIDDEN)
    w3, b3 = linear(keys[4], keys[5], HIDDEN, HIDDEN)

    def pad_out(w, b):
        w = jnp.pad(w, ((0, 0), (0, HIDDEN_PAD - w.shape[1])))
        b = jnp.pad(b, ((0, 0), (0, HIDDEN_PAD - b.shape[1])))
        return w, b

    def pad_in(w):
        return jnp.pad(w, ((0, HIDDEN_PAD - w.shape[0]), (0, 0)))

    w1, b1 = pad_out(w1, b1)
    w2, b2 = pad_out(pad_in(w2), b2)
    w3, b3 = pad_out(pad_in(w3), b3)
    return {
        "w1": w1.astype(jnp.bfloat16), "b1": b1,
        "w2": w2.astype(jnp.bfloat16), "b2": b2,
        "w3": w3.astype(jnp.bfloat16), "b3": b3,
    }


def _reference(x, params, *, bf16_elementwise, out_dtype):
    """Pure-JAX reference mirroring the kernel math exactly."""
    def layer(h_bf16, w, b):
        acc = jnp.dot(h_bf16, w, preferred_element_type=jnp.float32) + b
        if bf16_elementwise:
            return jnp.tanh(acc.astype(jnp.bfloat16))
        return jnp.tanh(acc)

    h1 = layer(x.astype(jnp.bfloat16), params["w1"], params["b1"])
    h2 = layer(h1.astype(jnp.bfloat16), params["w2"], params["b2"])
    h3 = layer(h2.astype(jnp.bfloat16), params["w3"], params["b3"])
    return h3[:, :HIDDEN].astype(out_dtype)


if __name__ == "__main__":
    key = jax.random.PRNGKey(0)
    kx, kp, kx2 = jax.random.split(key, 3)

    in_features = 32
    params = init_params(kp, in_features)

    bf16 = _BF16_ELEMENTWISE_DEFAULT
    odt = jnp.bfloat16 if bf16 else jnp.float32

    # Case 1: small batch (single grid step, full-array block).
    B = 8
    x = jax.random.normal(kx, (B, in_features), dtype=jnp.float32)
    policy_out, value_out = mlp_extractor_forward(
        x, params, bf16_elementwise=bf16, out_dtype=odt)
    jax.block_until_ready((policy_out, value_out))
    ref = _reference(x, params, bf16_elementwise=bf16, out_dtype=odt)
    assert policy_out.shape == (B, HIDDEN)
    assert value_out.shape == (B, HIDDEN)
    assert jnp.allclose(policy_out.astype(jnp.float32), ref.astype(jnp.float32),
                        atol=2e-2, rtol=2e-2)
    assert jnp.allclose(value_out.astype(jnp.float32), ref.astype(jnp.float32),
                        atol=2e-2, rtol=2e-2)

    # Case 2: batch > 256 (>= 2 grid steps, partial last block with masked writes).
    B2 = 260
    x2 = jax.random.normal(kx2, (B2, in_features), dtype=jnp.float32)
    p2, v2 = mlp_extractor_forward(x2, params, bf16_elementwise=bf16, out_dtype=odt)
    jax.block_until_ready((p2, v2))
    ref2 = _reference(x2, params, bf16_elementwise=bf16, out_dtype=odt)
    assert p2.shape == (B2, HIDDEN)
    assert jnp.allclose(p2.astype(jnp.float32), ref2.astype(jnp.float32),
                        atol=2e-2, rtol=2e-2)
    assert jnp.allclose(v2.astype(jnp.float32), ref2.astype(jnp.float32),
                        atol=2e-2, rtol=2e-2)

    print("KERNEL_OK")
</pallas_src>

<mosaic_0001>
module attributes {stable_mosaic.version = 11 : i64} {
  func.func @_mlp_kernel(%arg0: i32, %arg1: memref<8x32xf32, #tpu.memory_space<vmem>>, %arg2: memref<32x256xbf16, #tpu.memory_space<vmem>>, %arg3: memref<1x256xf32, #tpu.memory_space<vmem>>, %arg4: memref<256x256xbf16, #tpu.memory_space<vmem>>, %arg5: memref<1x256xf32, #tpu.memory_space<vmem>>, %arg6: memref<256x256xbf16, #tpu.memory_space<vmem>>, %arg7: memref<1x256xf32, #tpu.memory_space<vmem>>, %arg8: memref<8x150xbf16, #tpu.memory_space<vmem>>) attributes {dimension_semantics = [#tpu.dimension_semantics<parallel>], iteration_bounds = array<i64: 1>, scalar_prefetch = 0 : i64, scratch_operands = 0 : i64, tpu.core_type = #tpu.core_type<tc>, window_params = [{transform_indices = @transform_0, window_bounds = array<i64: 8, 32>}, {pipeline_mode = #tpu.pipeline_mode<synchronous>, transform_indices = @transform_1, window_bounds = array<i64: 32, 256>}, {pipeline_mode = #tpu.pipeline_mode<synchronous>, transform_indices = @transform_2, window_bounds = array<i64: 1, 256>}, {pipeline_mode = #tpu.pipeline_mode<synchronous>, transform_indices = @transform_3, window_bounds = array<i64: 256, 256>}, {pipeline_mode = #tpu.pipeline_mode<synchronous>, transform_indices = @transform_4, window_bounds = array<i64: 1, 256>}, {pipeline_mode = #tpu.pipeline_mode<synchronous>, transform_indices = @transform_5, window_bounds = array<i64: 256, 256>}, {pipeline_mode = #tpu.pipeline_mode<synchronous>, transform_indices = @transform_6, window_bounds = array<i64: 1, 256>}, {transform_indices = @transform_7, window_bounds = array<i64: 8, 150>}]} {
    %c0 = arith.constant 0 : index
    %c0_0 = arith.constant 0 : index
    %0 = vector.load %arg1[%c0, %c0_0] : memref<8x32xf32, #tpu.memory_space<vmem>>, vector<8x32xf32>
    %1 = arith.truncf %0 : vector<8x32xf32> to vector<8x32xbf16>
    %c0_1 = arith.constant 0 : index
    %c0_2 = arith.constant 0 : index
    %2 = vector.load %arg2[%c0_1, %c0_2] : memref<32x256xbf16, #tpu.memory_space<vmem>>, vector<32x256xbf16>
    %cst = arith.constant dense<0.000000e+00> : vector<8x256xf32>
    %3 = tpu.matmul %1, %2, %cst {dimension_numbers = #tpu.dot_dimension_numbers<[1], [0], [0], [1], [0, 0, 1, 1], [], []>} : vector<8x32xbf16>, vector<32x256xbf16>, vector<8x256xf32> -> vector<8x256xf32>
    %c0_3 = arith.constant 0 : index
    %c0_4 = arith.constant 0 : index
    %4 = vector.load %arg3[%c0_3, %c0_4] : memref<1x256xf32, #tpu.memory_space<vmem>>, vector<1x256xf32>
    %5 = vector.broadcast %4 : vector<1x256xf32> to vector<8x256xf32>
    %6 = arith.addf %3, %5 : vector<8x256xf32>
    %7 = arith.truncf %6 : vector<8x256xf32> to vector<8x256xbf16>
    %8 = math.tanh %7 : vector<8x256xbf16>
    %c0_5 = arith.constant 0 : index
    %c0_6 = arith.constant 0 : index
    %9 = vector.load %arg4[%c0_5, %c0_6] : memref<256x256xbf16, #tpu.memory_space<vmem>>, vector<256x256xbf16>
    %cst_7 = arith.constant dense<0.000000e+00> : vector<8x256xf32>
    %10 = tpu.matmul %8, %9, %cst_7 {dimension_numbers = #tpu.dot_dimension_numbers<[1], [0], [0], [1], [0, 0, 1, 1], [], []>} : vector<8x256xbf16>, vector<256x256xbf16>, vector<8x256xf32> -> vector<8x256xf32>
    %c0_8 = arith.constant 0 : index
    %c0_9 = arith.constant 0 : index
    %11 = vector.load %arg5[%c0_8, %c0_9] : memref<1x256xf32, #tpu.memory_space<vmem>>, vector<1x256xf32>
    %12 = vector.broadcast %11 : vector<1x256xf32> to vector<8x256xf32>
    %13 = arith.addf %10, %12 : vector<8x256xf32>
    %14 = arith.truncf %13 : vector<8x256xf32> to vector<8x256xbf16>
    %15 = math.tanh %14 : vector<8x256xbf16>
    %c0_10 = arith.constant 0 : index
    %c0_11 = arith.constant 0 : index
    %16 = vector.load %arg6[%c0_10, %c0_11] : memref<256x256xbf16, #tpu.memory_space<vmem>>, vector<256x256xbf16>
    %cst_12 = arith.constant dense<0.000000e+00> : vector<8x256xf32>
    %17 = tpu.matmul %15, %16, %cst_12 {dimension_numbers = #tpu.dot_dimension_numbers<[1], [0], [0], [1], [0, 0, 1, 1], [], []>} : vector<8x256xbf16>, vector<256x256xbf16>, vector<8x256xf32> -> vector<8x256xf32>
    %c0_13 = arith.constant 0 : index
    %c0_14 = arith.constant 0 : index
    %18 = vector.load %arg7[%c0_13, %c0_14] : memref<1x256xf32, #tpu.memory_space<vmem>>, vector<1x256xf32>
    %19 = vector.broadcast %18 : vector<1x256xf32> to vector<8x256xf32>
    %20 = arith.addf %17, %19 : vector<8x256xf32>
    %21 = arith.truncf %20 : vector<8x256xf32> to vector<8x256xbf16>
    %22 = math.tanh %21 : vector<8x256xbf16>
    %23 = vector.extract_strided_slice %22 {offsets = [0, 0], sizes = [8, 150], strides = [1, 1]} : vector<8x256xbf16> to vector<8x150xbf16>
    %c0_15 = arith.constant 0 : index
    %c0_16 = arith.constant 0 : index
    %24 = vector.load %arg8[%c0_15, %c0_16] : memref<8x150xbf16, #tpu.memory_space<vmem>>, vector<8x150xbf16>
    tpu.vector_store %arg8[%c0_15, %c0_16], %23 {strides = array<i32>} : memref<8x150xbf16, #tpu.memory_space<vmem>>, vector<8x150xbf16>,
    return
  }
  func.func @transform_0(%arg0: i32) -> (i32, i32) {
    %c0_i32 = arith.constant 0 : i32
    %c0_i32_0 = arith.constant 0 : i32
    return %arg0, %c0_i32 : i32, i32
  }
  func.func @transform_1(%arg0: i32) -> (i32, i32) {
    %c0_i32 = arith.constant 0 : i32
    %c0_i32_0 = arith.constant 0 : i32
    %c0_i32_1 = arith.constant 0 : i32
    return %c0_i32, %c0_i32_0 : i32, i32
  }
  func.func @transform_2(%arg0: i32) -> (i32, i32) {
    %c0_i32 = arith.constant 0 : i32
    %c0_i32_0 = arith.constant 0 : i32
    %c0_i32_1 = arith.constant 0 : i32
    return %c0_i32, %c0_i32_0 : i32, i32
  }
  func.func @transform_3(%arg0: i32) -> (i32, i32) {
    %c0_i32 = arith.constant 0 : i32
    %c0_i32_0 = arith.constant 0 : i32
    %c0_i32_1 = arith.constant 0 : i32
    return %c0_i32, %c0_i32_0 : i32, i32
  }
  func.func @transform_4(%arg0: i32) -> (i32, i32) {
    %c0_i32 = arith.constant 0 : i32
    %c0_i32_0 = arith.constant 0 : i32
    %c0_i32_1 = arith.constant 0 : i32
    return %c0_i32, %c0_i32_0 : i32, i32
  }
  func.func @transform_5(%arg0: i32) -> (i32, i32) {
    %c0_i32 = arith.constant 0 : i32
    %c0_i32_0 = arith.constant 0 : i32
    %c0_i32_1 = arith.constant 0 : i32
    return %c0_i32, %c0_i32_0 : i32, i32
  }
  func.func @transform_6(%arg0: i32) -> (i32, i32) {
    %c0_i32 = arith.constant 0 : i32
    %c0_i32_0 = arith.constant 0 : i32
    %c0_i32_1 = arith.constant 0 : i32
    return %c0_i32, %c0_i32_0 : i32, i32
  }
  func.func @transform_7(%arg0: i32) -> (i32, i32) {
    %c0_i32 = arith.constant 0 : i32
    %c0_i32_0 = arith.constant 0 : i32
    return %arg0, %c0_i32 : i32, i32
  }
}

</mosaic_0001>

<llo_original>
// kernel: _forward.1
$region0: #{_forward.1}
  #allocation0 [shape = 'u32[]', space=smem, size = 0x4, offset = 0x4, fixed_abs, tag = 'smem constant byte address 0x4 - core index']
  #allocation1 [shape = 'u32[144,128]{1,0:T(1,128)}', space=vmem, size = 0x12000, scoped, tag = 'internal scratch']
  %s0 = inlined_call_operand.hbm [shape: f32[8,32], index: 0, kind: input, shape index: {}]
  %s1 = inlined_call_operand.hbm [shape: bf16[32,256], index: 1, kind: input, shape index: {}]
  %s2 = inlined_call_operand.vmem [shape: f32[1,256], index: 2, kind: input, shape index: {}]
  %s3 = inlined_call_operand.hbm [shape: bf16[256,256], index: 3, kind: input, shape index: {}]
  %s4 = inlined_call_operand.vmem [shape: f32[1,256], index: 4, kind: input, shape index: {}]
  %s5 = inlined_call_operand.hbm [shape: bf16[256,256], index: 5, kind: input, shape index: {}]
  %s6 = inlined_call_operand.vmem [shape: f32[1,256], index: 6, kind: input, shape index: {}]
  %s7 = inlined_call_operand.vmem [shape: bf16[8,150], index: 7, kind: output, shape index: {}]
  %s8 = sld [smem:[#allocation0]]
  $region54: #{_forward.1} parent=0
    _
  %s10 = ssub.s32 1, %s8
  %s11 = scalar_select 0, %s10, %s8
  $region1: #{_forward.1} parent=0
    #allocation2 [shape = 'u8[4096]{0}', space=vmem, size = 0x1000, scoped, tag = 'input window, operand 0, single buffered']
    #allocation3 [shape = 's32[1]{0}', space=sflag, size = 0x4, scoped, tag = 'scoped memory for _forward.1']
    #allocation4 [shape = 'u8[16384]{0}', space=vmem, size = 0x4000, scoped, tag = 'input window, operand 1, single buffered']
    #allocation5 [shape = 's32[1]{0}', space=sflag, size = 0x4, scoped, tag = 'scoped memory for _forward.1']
    #allocation6 [shape = 'u8[131072]{0}', space=vmem, size = 0x20000, scoped, tag = 'input window, operand 3, single buffered']
    #allocation7 [shape = 'u8[131072]{0}', space=vmem, size = 0x20000, scoped, tag = 'input window, operand 5, single buffered']
    #allocation8 [shape = 's32[1]{0}', space=sflag, size = 0x4, scoped, tag = 'scoped memory for _forward.1']
    %12 = vsyncpa [#allocation3], 0
    %13 = vsyncpa [#allocation5], 0
    %14 = vsyncpa [#allocation8], 0
    // Predicated region
    $region2: #{_forward.1} parent=1 // pred_check
      _
    $region3: #{_forward.1} parent=1 // pred_check_branch
      %16 = sbr.rel (0) target = $region5
    $region4: #{_forward.1} parent=1 // pred_region
      %s18 = ssub.s32 128, 128
      %19 = vsyncadd [#allocation3], %s18
      %s21 = sshll.u32 [#allocation2], 4
      %s22 = int_to_ptr.vmem [resolvable:$true] %s21
      %24 = dma.hbm_to_vmem [thread:$0]  %s0, 128, %s22, [#allocation3]
    $region5: #{_forward.1} parent=1 // pred_fallthru
      _
    // Predicated region
    $region6: #{_forward.1} parent=1 // pred_check
      _
    $region7: #{_forward.1} parent=1 // pred_check_branch
      %26 = sbr.rel (0) target = $region9
    $region8: #{_forward.1} parent=1 // pred_region
      %s28 = ssub.s32 512, 512
      %29 = vsyncadd [#allocation5], %s28
      %s30 = sshll.u32 [#allocation4], 4
      %s31 = int_to_ptr.vmem [resolvable:$true] %s30
      %36 = dma.hbm_to_vmem [thread:$0]  %s1, 512, %s31, [#allocation5], 128, 128, 8
    $region9: #{_forward.1} parent=1 // pred_fallthru
      _
    // Predicated region
    $region10: #{_forward.1} parent=1 // pred_check
      _
    $region11: #{_forward.1} parent=1 // pred_check_branch
      %38 = sbr.rel (0) target = $region13
    $region12: #{_forward.1} parent=1 // pred_region
      _
    $region13: #{_forward.1} parent=1 // pred_fallthru
      _
    // Predicated region
    $region14: #{_forward.1} parent=1 // pred_check
      _
    $region15: #{_forward.1} parent=1 // pred_check_branch
      %40 = sbr.rel (0) target = $region17
    $region16: #{_forward.1} parent=1 // pred_region
      %s42 = ssub.s32 4096, 4096
      %43 = vsyncadd [#allocation5], %s42
      %s44 = sshll.u32 [#allocation6], 4
      %s45 = int_to_ptr.vmem [resolvable:$true] %s44
      %50 = dma.hbm_to_vmem [thread:$0]  %s3, 4096, %s45, [#allocation5], 128, 128, 8
    $region17: #{_forward.1} parent=1 // pred_fallthru
      _
    // Predicated region
    $region18: #{_forward.1} parent=1 // pred_check
      _
    $region19: #{_forward.1} parent=1 // pred_check_branch
      %52 = sbr.rel (0) target = $region21
    $region20: #{_forward.1} parent=1 // pred_region
      _
    $region21: #{_forward.1} parent=1 // pred_fallthru
      _
    // Predicated region
    $region22: #{_forward.1} parent=1 // pred_check
      _
    $region23: #{_forward.1} parent=1 // pred_check_branch
      %54 = sbr.rel (0) target = $region25
    $region24: #{_forward.1} parent=1 // pred_region
      %s56 = ssub.s32 4096, 4096
      %57 = vsyncadd [#allocation8], %s56
      %s58 = sshll.u32 [#allocation7], 4
      %s59 = int_to_ptr.vmem [resolvable:$true] %s58
      %64 = dma.hbm_to_vmem [thread:$0]  %s5, 4096, %s59, [#allocation8], 128, 128, 8
    $region25: #{_forward.1} parent=1 // pred_fallthru
      _
    // Predicated region
    $region26: #{_forward.1} parent=1 // pred_check
      _
    $region27: #{_forward.1} parent=1 // pred_check_branch
      %66 = sbr.rel (0) target = $region29
    $region28: #{_forward.1} parent=1 // pred_region
      _
    $region29: #{_forward.1} parent=1 // pred_fallthru
      _
    // Predicated region
    $region30: #{_forward.1} parent=1 // pred_check
      _
    $region31: #{_forward.1} parent=1 // pred_check_branch
      %68 = sbr.rel (0) target = $region33
    $region32: #{_forward.1} parent=1 // pred_region
      %69 = dma.done [#allocation3], 128
    $region33: #{_forward.1} parent=1 // pred_fallthru
      _
    // Predicated region
    $region34: #{_forward.1} parent=1 // pred_check
      _
    $region35: #{_forward.1} parent=1 // pred_check_branch
      %71 = sbr.rel (0) target = $region37
    $region36: #{_forward.1} parent=1 // pred_region
      %72 = dma.done [#allocation5], 512
    $region37: #{_forward.1} parent=1 // pred_fallthru
      _
    // Predicated region
    $region38: #{_forward.1} parent=1 // pred_check
      _
    $region39: #{_forward.1} parent=1 // pred_check_branch
      %74 = sbr.rel (0) target = $region41
    $region40: #{_forward.1} parent=1 // pred_region
      %75 = dma.done [#allocation5], 4096
    $region41: #{_forward.1} parent=1 // pred_fallthru
      _
    // Predicated region
    $region42: #{_forward.1} parent=1 // pred_check
      _
    $region43: #{_forward.1} parent=1 // pred_check_branch
      %77 = sbr.rel (0) target = $region45
    $region44: #{_forward.1} parent=1 // pred_region
      %78 = dma.done [#allocation8], 4096
    $region45: #{_forward.1} parent=1 // pred_fallthru
      _
    %v80 = vld [vmem:[#allocation2] sm:$0xff]
    %v81 = vpack.c.bf16 %v80, %v80
    %v82 = vld [vmem:[#allocation4] sm:$0xff]
    %v83 = vld [vmem:[#allocation4 + $0x8] sm:$0xff]
    %v84 = vld [vmem:[#allocation4 + $0x10] sm:$0xff]
    %v85 = vld [vmem:[#allocation4 + $0x18] sm:$0xff]
    %v86 = vld [vmem:[%s2] sm:$0x3]
    %v88 = vlaneseq
    %v89 = vshrl.u32 %v88, 7
    %v90 = vsub.s32 0, %v89
    %v91 = vrot.slane %v86, %v90
    %v92 = vlaneseq
    %v93 = vshrl.u32 %v92, 7
    %v94 = vsub.s32 1, %v93
    %v95 = vrot.slane %v86, %v94
    %v102 = vunpack.c.l.b16 %v82
    %v103 = vunpack.c.h.b16 %v82
    %v104 = vunpack.c.l.b16 %v83
    %v105 = vunpack.c.h.b16 %v83
    %v106 = vunpack.c.l.b16 %v84
    %v107 = vunpack.c.h.b16 %v84
    %v108 = vunpack.c.l.b16 %v85
    %v109 = vunpack.c.h.b16 %v85
    %v110 = vpack.c.b16 %v104, %v102
    %v111 = vpack.c.b16 %v105, %v103
    %v112 = vpack.c.b16 %v108, %v106
    %v113 = vpack.c.b16 %v109, %v107
    %vm118 = vcmask 261120
    %v120 = vsel %vm118, %v81, 0
    %122 = vmatprep.subr.bf16.mxu0 %v111
    %123 = vmatpush1.bf16.msra.mxu0 %v110
    %124 = vmatprep.subr.bf16.mxu0 %v113
    %125 = vmatpush1.bf16.msra.mxu0 %v112
    %126 = vmatprep.subr.bf16.mxu0 0
    %127 = vmatpush1.bf16.msra.mxu0 0
    %128 = vmatprep.subr.bf16.mxu0 0
    %129 = vmatpush1.bf16.msra.mxu0 0
    %130 = vmatprep.subr.bf16.mxu0 0
    %131 = vmatpush1.bf16.msra.mxu0 0
    %132 = vmatprep.subr.bf16.mxu0 0
    %133 = vmatpush1.bf16.msra.mxu0 0
    %134 = vmatprep.subr.bf16.mxu0 0
    %135 = vmatpush1.bf16.msra.mxu0 0
    %136 = vmatprep.subr.bf16.mxu0 0
    %137 = vmatpush1.bf16.msra.mxu0 0
    %138 = vmatprep.subr.bf16.mxu0 0
    %139 = vmatpush1.bf16.msra.mxu0 0
    %140 = vmatprep.subr.bf16.mxu0 0
    %141 = vmatpush1.bf16.msra.mxu0 0
    %142 = vmatprep.subr.bf16.mxu0 0
    %143 = vmatpush1.bf16.msra.mxu0 0
    %144 = vmatprep.subr.bf16.mxu0 0
    %145 = vmatpush1.bf16.msra.mxu0 0
    %146 = vmatprep.subr.bf16.mxu0 0
    %147 = vmatpush1.bf16.msra.mxu0 0
    %148 = vmatprep.subr.bf16.mxu0 0
    %149 = vmatpush1.bf16.msra.mxu0 0
    %150 = vmatprep.subr.bf16.mxu0 0
    %151 = vmatpush1.bf16.msra.mxu0 0
    %152 = vmatprep.subr.bf16.mxu0 0
    %153 = vmatpush1.bf16.msra.mxu0 0
    %154 = vmatprep.mubr.bf16.mxu0 0
    %155 = vmatmul.mubr.bf16.gmra.mrb[0].mxu0 %v120
    %v156 = vpop.f32.mrb[0].mxu0
    %v157 = vadd.f32 %v91, %v156
    %v158 = vpop.f32.mrb[0].mxu0
    %v159 = vadd.f32 %v95, %v158
    %v160 = vpop.f32.mrb[0].mxu0
    %v161 = vpop.f32.mrb[0].mxu0
    %162 = vdwg.mxu0
    %v163 = vpack.c.bf16 %v157, %v157
    %v164 = vpack.c.bf16 %v159, %v159
    %v165 = vtanh.bf16.pop %v163
    %v166 = vtanh.bf16.pop %v164
    %v167 = vld [vmem:[#allocation6] sm:$0xff]
    %v168 = vld [vmem:[#allocation6 + $0x8] sm:$0xff]
    %v169 = vld [vmem:[#allocation6 + $0x10] sm:$0xff]
    %v170 = vld [vmem:[#allocation6 + $0x18] sm:$0xff]
    %v171 = vld [vmem:[#allocation6 + $0x20] sm:$0xff]
    %v172 = vld [vmem:[#allocation6 + $0x28] sm:$0xff]
    %v173 = vld [vmem:[#allocation6 + $0x30] sm:$0xff]
    %v174 = vld [vmem:[#allocation6 + $0x38] sm:$0xff]
    %v175 = vld [vmem:[#allocation6 + $0x40] sm:$0xff]
    %v176 = vld [vmem:[#allocation6 + $0x48] sm:$0xff]
    %v177 = vld [vmem:[#allocation6 + $0x50] sm:$0xff]
    %v178 = vld [vmem:[#allocation6 + $0x58] sm:$0xff]
    %v179 = vld [vmem:[#allocation6 + $0x60] sm:$0xff]
    %v180 = vld [vmem:[#allocation6 + $0x68] sm:$0xff]
    %v181 = vld [vmem:[#allocation6 + $0x70] sm:$0xff]
    %v182 = vld [vmem:[#allocation6 + $0x78] sm:$0xff]
    %v183 = vld [vmem:[#allocation6 + $0x80] sm:$0xff]
    %v184 = vld [vmem:[#allocation6 + $0x88] sm:$0xff]
    %v185 = vld [vmem:[#allocation6 + $0x90] sm:$0xff]
    %v186 = vld [vmem:[#allocation6 + $0x98] sm:$0xff]
    %v187 = vld [vmem:[#allocation6 + $0xa0] sm:$0xff]
    %v188 = vld [vmem:[#allocation6 + $0xa8] sm:$0xff]
    %v189 = vld [vmem:[#allocation6 + $0xb0] sm:$0xff]
    %v190 = vld [vmem:[#allocation6 + $0xb8] sm:$0xff]
    %v191 = vld [vmem:[#allocation6 + $0xc0] sm:$0xff]
    %v192 = vld [vmem:[#allocation6 + $0xc8] sm:$0xff]
    %v193 = vld [vmem:[#allocation6 + $0xd0] sm:$0xff]
    %v194 = vld [vmem:[#allocation6 + $0xd8] sm:$0xff]
    %v195 = vld [vmem:[#allocation6 + $0xe0] sm:$0xff]
    %v196 = vld [vmem:[#allocation6 + $0xe8] sm:$0xff]
    %v197 = vld [vmem:[#allocation6 + $0xf0] sm:$0xff]
    %v198 = vld [vmem:[#allocation6 + $0xf8] sm:$0xff]
    %v199 = vld [vmem:[%s4] sm:$0x3]
    %v201 = vlaneseq
    %v202 = vshrl.u32 %v201, 7
    %v203 = vsub.s32 0, %v202
    %v204 = vrot.slane %v199, %v203
    %v205 = vlaneseq
    %v206 = vshrl.u32 %v205, 7
    %v207 = vsub.s32 1, %v206
    %v208 = vrot.slane %v199, %v207
    %v243 = vunpack.c.l.b16 %v167
    %v244 = vunpack.c.h.b16 %v167
    %v245 = vunpack.c.l.b16 %v168
    %v246 = vunpack.c.h.b16 %v168
    %v247 = vunpack.c.l.b16 %v169
    %v248 = vunpack.c.h.b16 %v169
    %v249 = vunpack.c.l.b16 %v170
    %v250 = vunpack.c.h.b16 %v170
    %v251 = vunpack.c.l.b16 %v171
    %v252 = vunpack.c.h.b16 %v171
    %v253 = vunpack.c.l.b16 %v172
    %v254 = vunpack.c.h.b16 %v172
    %v255 = vunpack.c.l.b16 %v173
    %v256 = vunpack.c.h.b16 %v173
    %v257 = vunpack.c.l.b16 %v174
    %v258 = vunpack.c.h.b16 %v174
    %v259 = vunpack.c.l.b16 %v175
    %v260 = vunpack.c.h.b16 %v175
    %v261 = vunpack.c.l.b16 %v176
    %v262 = vunpack.c.h.b16 %v176
    %v263 = vunpack.c.l.b16 %v177
    %v264 = vunpack.c.h.b16 %v177
    %v265 = vunpack.c.l.b16 %v178
    %v266 = vunpack.c.h.b16 %v178
    %v267 = vunpack.c.l.b16 %v179
    %v268 = vunpack.c.h.b16 %v179
    %v269 = vunpack.c.l.b16 %v180
    %v270 = vunpack.c.h.b16 %v180
    %v271 = vunpack.c.l.b16 %v181
    %v272 = vunpack.c.h.b16 %v181
    %v273 = vunpack.c.l.b16 %v182
    %v274 = vunpack.c.h.b16 %v182
    %v275 = vunpack.c.l.b16 %v183
    %v276 = vunpack.c.h.b16 %v183
    %v277 = vunpack.c.l.b16 %v184
    %v278 = vunpack.c.h.b16 %v184
    %v279 = vunpack.c.l.b16 %v185
    %v280 = vunpack.c.h.b16 %v185
    %v281 = vunpack.c.l.b16 %v186
    %v282 = vunpack.c.h.b16 %v186
    %v283 = vunpack.c.l.b16 %v187
    %v284 = vunpack.c.h.b16 %v187
    %v285 = vunpack.c.l.b16 %v188
    %v286 = vunpack.c.h.b16 %v188
    %v287 = vunpack.c.l.b16 %v189
    %v288 = vunpack.c.h.b16 %v189
    %v289 = vunpack.c.l.b16 %v190
    %v290 = vunpack.c.h.b16 %v190
    %v291 = vunpack.c.l.b16 %v191
    %v292 = vunpack.c.h.b16 %v191
    %v293 = vunpack.c.l.b16 %v192
    %v294 = vunpack.c.h.b16 %v192
    %v295 = vunpack.c.l.b16 %v193
    %v296 = vunpack.c.h.b16 %v193
    %v297 = vunpack.c.l.b16 %v194
    %v298 = vunpack.c.h.b16 %v194
    %v299 = vunpack.c.l.b16 %v195
    %v300 = vunpack.c.h.b16 %v195
    %v301 = vunpack.c.l.b16 %v196
    %v302 = vunpack.c.h.b16 %v196
    %v303 = vunpack.c.l.b16 %v197
    %v304 = vunpack.c.h.b16 %v197
    %v305 = vunpack.c.l.b16 %v198
    %v306 = vunpack.c.h.b16 %v198
    %v307 = vpack.c.b16 %v245, %v243
    %v308 = vpack.c.b16 %v246, %v244
    %v309 = vpack.c.b16 %v249, %v247
    %v310 = vpack.c.b16 %v250, %v248
    %v311 = vpack.c.b16 %v253, %v251
    %v312 = vpack.c.b16 %v254, %v252
    %v313 = vpack.c.b16 %v257, %v255
    %v314 = vpack.c.b16 %v258, %v256
    %v315 = vpack.c.b16 %v261, %v259
    %v316 = vpack.c.b16 %v262, %v260
    %v317 = vpack.c.b16 %v265, %v263
    %v318 = vpack.c.b16 %v266, %v264
    %v319 = vpack.c.b16 %v269, %v267
    %v320 = vpack.c.b16 %v270, %v268
    %v321 = vpack.c.b16 %v273, %v271
    %v322 = vpack.c.b16 %v274, %v272
    %v323 = vpack.c.b16 %v277, %v275
    %v324 = vpack.c.b16 %v278, %v276
    %v325 = vpack.c.b16 %v281, %v279
    %v326 = vpack.c.b16 %v282, %v280
    %v327 = vpack.c.b16 %v285, %v283
    %v328 = vpack.c.b16 %v286, %v284
    %v329 = vpack.c.b16 %v289, %v287
    %v330 = vpack.c.b16 %v290, %v288
    %v331 = vpack.c.b16 %v293, %v291
    %v332 = vpack.c.b16 %v294, %v292
    %v333 = vpack.c.b16 %v297, %v295
    %v334 = vpack.c.b16 %v298, %v296
    %v335 = vpack.c.b16 %v301, %v299
    %v336 = vpack.c.b16 %v302, %v300
    %v337 = vpack.c.b16 %v305, %v303
    %v338 = vpack.c.b16 %v306, %v304
    %371 = vmatprep.subr.bf16.mxu0 %v308
    %372 = vmatpush1.bf16.msra.mxu0 %v307
    %373 = vmatprep.subr.bf16.mxu0 %v310
    %374 = vmatpush1.bf16.msra.mxu0 %v309
    %375 = vmatprep.subr.bf16.mxu0 %v312
    %376 = vmatpush1.bf16.msra.mxu0 %v311
    %377 = vmatprep.subr.bf16.mxu0 %v314
    %378 = vmatpush1.bf16.msra.mxu0 %v313
    %379 = vmatprep.subr.bf16.mxu0 %v316
    %380 = vmatpush1.bf16.msra.mxu0 %v315
    %381 = vmatprep.subr.bf16.mxu0 %v318
    %382 = vmatpush1.bf16.msra.mxu0 %v317
    %383 = vmatprep.subr.bf16.mxu0 %v320
    %384 = vmatpush1.bf16.msra.mxu0 %v319
    %385 = vmatprep.subr.bf16.mxu0 %v322
    %386 = vmatpush1.bf16.msra.mxu0 %v321
    %387 = vmatprep.subr.bf16.mxu0 %v324
    %388 = vmatpush1.bf16.msra.mxu0 %v323
    %389 = vmatprep.subr.bf16.mxu0 %v326
    %390 = vmatpush1.bf16.msra.mxu0 %v325
    %391 = vmatprep.subr.bf16.mxu0 %v328
    %392 = vmatpush1.bf16.msra.mxu0 %v327
    %393 = vmatprep.subr.bf16.mxu0 %v330
    %394 = vmatpush1.bf16.msra.mxu0 %v329
    %395 = vmatprep.subr.bf16.mxu0 %v332
    %396 = vmatpush1.bf16.msra.mxu0 %v331
    %397 = vmatprep.subr.bf16.mxu0 %v334
    %398 = vmatpush1.bf16.msra.mxu0 %v333
    %399 = vmatprep.subr.bf16.mxu0 %v336
    %400 = vmatpush1.bf16.msra.mxu0 %v335
    %401 = vmatprep.subr.bf16.mxu0 %v338
    %402 = vmatpush1.bf16.msra.mxu0 %v337
    %403 = vmatprep.mubr.bf16.mxu0 %v166
    %404 = vmatmul.mubr.bf16.gmra.mrb[0].mxu0 %v165
    %v405 = vpop.f32.mrb[0].mxu0
    %v406 = vadd.f32 %v204, %v405
    %v407 = vpop.f32.mrb[0].mxu0
    %v408 = vadd.f32 %v208, %v407
    %v409 = vpop.f32.mrb[0].mxu0
    %v410 = vpop.f32.mrb[0].mxu0
    %411 = vdwg.mxu0
    %v412 = vpack.c.bf16 %v406, %v406
    %v413 = vpack.c.bf16 %v408, %v408
    %v414 = vtanh.bf16.pop %v412
    %v415 = vtanh.bf16.pop %v413
    %v416 = vld [vmem:[#allocation7] sm:$0xff]
    %v417 = vld [vmem:[#allocation7 + $0x8] sm:$0xff]
    %v418 = vld [vmem:[#allocation7 + $0x10] sm:$0xff]
    %v419 = vld [vmem:[#allocation7 + $0x18] sm:$0xff]
    %v420 = vld [vmem:[#allocation7 + $0x20] sm:$0xff]
    %v421 = vld [vmem:[#allocation7 + $0x28] sm:$0xff]
    %v422 = vld [vmem:[#allocation7 + $0x30] sm:$0xff]
    %v423 = vld [vmem:[#allocation7 + $0x38] sm:$0xff]
    %v424 = vld [vmem:[#allocation7 + $0x40] sm:$0xff]
    %v425 = vld [vmem:[#allocation7 + $0x48] sm:$0xff]
    %v426 = vld [vmem:[#allocation7 + $0x50] sm:$0xff]
    %v427 = vld [vmem:[#allocation7 + $0x58] sm:$0xff]
    %v428 = vld [vmem:[#allocation7 + $0x60] sm:$0xff]
    %v429 = vld [vmem:[#allocation7 + $0x68] sm:$0xff]
    %v430 = vld [vmem:[#allocation7 + $0x70] sm:$0xff]
    %v431 = vld [vmem:[#allocation7 + $0x78] sm:$0xff]
    %v432 = vld [vmem:[#allocation7 + $0x80] sm:$0xff]
    %v433 = vld [vmem:[#allocation7 + $0x88] sm:$0xff]
    %v434 = vld [vmem:[#allocation7 + $0x90] sm:$0xff]
    %v435 = vld [vmem:[#allocation7 + $0x98] sm:$0xff]
    %v436 = vld [vmem:[#allocation7 + $0xa0] sm:$0xff]
    %v437 = vld [vmem:[#allocation7 + $0xa8] sm:$0xff]
    %v438 = vld [vmem:[#allocation7 + $0xb0] sm:$0xff]
    %v439 = vld [vmem:[#allocation7 + $0xb8] sm:$0xff]
    %v440 = vld [vmem:[#allocation7 + $0xc0] sm:$0xff]
    %v441 = vld [vmem:[#allocation7 + $0xc8] sm:$0xff]
    %v442 = vld [vmem:[#allocation7 + $0xd0] sm:$0xff]
    %v443 = vld [vmem:[#allocation7 + $0xd8] sm:$0xff]
    %v444 = vld [vmem:[#allocation7 + $0xe0] sm:$0xff]
    %v445 = vld [vmem:[#allocation7 + $0xe8] sm:$0xff]
    %v446 = vld [vmem:[#allocation7 + $0xf0] sm:$0xff]
    %v447 = vld [vmem:[#allocation7 + $0xf8] sm:$0xff]
    %v448 = vld [vmem:[%s6] sm:$0x3]
    %v450 = vlaneseq
    %v451 = vshrl.u32 %v450, 7
    %v452 = vsub.s32 0, %v451
    %v453 = vrot.slane %v448, %v452
    %v454 = vlaneseq
    %v455 = vshrl.u32 %v454, 7
    %v456 = vsub.s32 1, %v455
    %v457 = vrot.slane %v448, %v456
    %v492 = vunpack.c.l.b16 %v416
    %v493 = vunpack.c.h.b16 %v416
    %v494 = vunpack.c.l.b16 %v417
    %v495 = vunpack.c.h.b16 %v417
    %v496 = vunpack.c.l.b16 %v418
    %v497 = vunpack.c.h.b16 %v418
    %v498 = vunpack.c.l.b16 %v419
    %v499 = vunpack.c.h.b16 %v419
    %v500 = vunpack.c.l.b16 %v420
    %v501 = vunpack.c.h.b16 %v420
    %v502 = vunpack.c.l.b16 %v421
    %v503 = vunpack.c.h.b16 %v421
    %v504 = vunpack.c.l.b16 %v422
    %v505 = vunpack.c.h.b16 %v422
    %v506 = vunpack.c.l.b16 %v423
    %v507 = vunpack.c.h.b16 %v423
    %v508 = vunpack.c.l.b16 %v424
    %v509 = vunpack.c.h.b16 %v424
    %v510 = vunpack.c.l.b16 %v425
    %v511 = vunpack.c.h.b16 %v425
    %v512 = vunpack.c.l.b16 %v426
    %v513 = vunpack.c.h.b16 %v426
    %v514 = vunpack.c.l.b16 %v427
    %v515 = vunpack.c.h.b16 %v427
    %v516 = vunpack.c.l.b16 %v428
    %v517 = vunpack.c.h.b16 %v428
    %v518 = vunpack.c.l.b16 %v429
    %v519 = vunpack.c.h.b16 %v429
    %v520 = vunpack.c.l.b16 %v430
    %v521 = vunpack.c.h.b16 %v430
    %v522 = vunpack.c.l.b16 %v431
    %v523 = vunpack.c.h.b16 %v431
    %v524 = vunpack.c.l.b16 %v432
    %v525 = vunpack.c.h.b16 %v432
    %v526 = vunpack.c.l.b16 %v433
    %v527 = vunpack.c.h.b16 %v433
    %v528 = vunpack.c.l.b16 %v434
    %v529 = vunpack.c.h.b16 %v434
    %v530 = vunpack.c.l.b16 %v435
    %v531 = vunpack.c.h.b16 %v435
    %v532 = vunpack.c.l.b16 %v436
    %v533 = vunpack.c.h.b16 %v436
    %v534 = vunpack.c.l.b16 %v437
    %v535 = vunpack.c.h.b16 %v437
    %v536 = vunpack.c.l.b16 %v438
    %v537 = vunpack.c.h.b16 %v438
    %v538 = vunpack.c.l.b16 %v439
    %v539 = vunpack.c.h.b16 %v439
    %v540 = vunpack.c.l.b16 %v440
    %v541 = vunpack.c.h.b16 %v440
    %v542 = vunpack.c.l.b16 %v441
    %v543 = vunpack.c.h.b16 %v441
    %v544 = vunpack.c.l.b16 %v442
    %v545 = vunpack.c.h.b16 %v442
    %v546 = vunpack.c.l.b16 %v443
    %v547 = vunpack.c.h.b16 %v443
    %v548 = vunpack.c.l.b16 %v444
    %v549 = vunpack.c.h.b16 %v444
    %v550 = vunpack.c.l.b16 %v445
    %v551 = vunpack.c.h.b16 %v445
    %v552 = vunpack.c.l.b16 %v446
    %v553 = vunpack.c.h.b16 %v446
    %v554 = vunpack.c.l.b16 %v447
    %v555 = vunpack.c.h.b16 %v447
    %v556 = vpack.c.b16 %v494, %v492
    %v557 = vpack.c.b16 %v495, %v493
    %v558 = vpack.c.b16 %v498, %v496
    %v559 = vpack.c.b16 %v499, %v497
    %v560 = vpack.c.b16 %v502, %v500
    %v561 = vpack.c.b16 %v503, %v501
    %v562 = vpack.c.b16 %v506, %v504
    %v563 = vpack.c.b16 %v507, %v505
    %v564 = vpack.c.b16 %v510, %v508
    %v565 = vpack.c.b16 %v511, %v509
    %v566 = vpack.c.b16 %v514, %v512
    %v567 = vpack.c.b16 %v515, %v513
    %v568 = vpack.c.b16 %v518, %v516
    %v569 = vpack.c.b16 %v519, %v517
    %v570 = vpack.c.b16 %v522, %v520
    %v571 = vpack.c.b16 %v523, %v521
    %v572 = vpack.c.b16 %v526, %v524
    %v573 = vpack.c.b16 %v527, %v525
    %v574 = vpack.c.b16 %v530, %v528
    %v575 = vpack.c.b16 %v531, %v529
    %v576 = vpack.c.b16 %v534, %v532
    %v577 = vpack.c.b16 %v535, %v533
    %v578 = vpack.c.b16 %v538, %v536
    %v579 = vpack.c.b16 %v539, %v537
    %v580 = vpack.c.b16 %v542, %v540
    %v581 = vpack.c.b16 %v543, %v541
    %v582 = vpack.c.b16 %v546, %v544
    %v583 = vpack.c.b16 %v547, %v545
    %v584 = vpack.c.b16 %v550, %v548
    %v585 = vpack.c.b16 %v551, %v549
    %v586 = vpack.c.b16 %v554, %v552
    %v587 = vpack.c.b16 %v555, %v553
    %620 = vmatprep.subr.bf16.mxu0 %v557
    %621 = vmatpush1.bf16.msra.mxu0 %v556
    %622 = vmatprep.subr.bf16.mxu0 %v559
    %623 = vmatpush1.bf16.msra.mxu0 %v558
    %624 = vmatprep.subr.bf16.mxu0 %v561
    %625 = vmatpush1.bf16.msra.mxu0 %v560
    %626 = vmatprep.subr.bf16.mxu0 %v563
    %627 = vmatpush1.bf16.msra.mxu0 %v562
    %628 = vmatprep.subr.bf16.mxu0 %v565
    %629 = vmatpush1.bf16.msra.mxu0 %v564
    %630 = vmatprep.subr.bf16.mxu0 %v567
    %631 = vmatpush1.bf16.msra.mxu0 %v566
    %632 = vmatprep.subr.bf16.mxu0 %v569
    %633 = vmatpush1.bf16.msra.mxu0 %v568
    %634 = vmatprep.subr.bf16.mxu0 %v571
    %635 = vmatpush1.bf16.msra.mxu0 %v570
    %636 = vmatprep.subr.bf16.mxu0 %v573
    %637 = vmatpush1.bf16.msra.mxu0 %v572
    %638 = vmatprep.subr.bf16.mxu0 %v575
    %639 = vmatpush1.bf16.msra.mxu0 %v574
    %640 = vmatprep.subr.bf16.mxu0 %v577
    %641 = vmatpush1.bf16.msra.mxu0 %v576
    %642 = vmatprep.subr.bf16.mxu0 %v579
    %643 = vmatpush1.bf16.msra.mxu0 %v578
    %644 = vmatprep.subr.bf16.mxu0 %v581
    %645 = vmatpush1.bf16.msra.mxu0 %v580
    %646 = vmatprep.subr.bf16.mxu0 %v583
    %647 = vmatpush1.bf16.msra.mxu0 %v582
    %648 = vmatprep.subr.bf16.mxu0 %v585
    %649 = vmatpush1.bf16.msra.mxu0 %v584
    %650 = vmatprep.subr.bf16.mxu0 %v587
    %651 = vmatpush1.bf16.msra.mxu0 %v586
    %652 = vmatprep.mubr.bf16.mxu0 %v415
    %653 = vmatmul.mubr.bf16.gmra.mrb[0].mxu0 %v414
    %v654 = vpop.f32.mrb[0].mxu0
    %v655 = vadd.f32 %v453, %v654
    %v656 = vpop.f32.mrb[0].mxu0
    %v657 = vadd.f32 %v457, %v656
    %v658 = vpop.f32.mrb[0].mxu0
    %v659 = vpop.f32.mrb[0].mxu0
    %660 = vdwg.mxu0
    %v661 = vpack.c.bf16 %v655, %v655
    %v662 = vpack.c.bf16 %v657, %v657
    %v663 = vtanh.bf16.pop %v661
    %v664 = vtanh.bf16.pop %v662
    %v667 = vunpack.c.l.b16 %v663
    %v668 = vunpack.c.l.b16 %v664
    %v669 = vpack.c.b16 %v668, %v667
    %vm671 = vcmask 1043456
    %vm672 = vcmask 179204
    %vm673 = vmor %vm672, %vm671
    %674 = vst.msk [vmem:[%s7] sm:$0xff] %vm673, %v669
    // Predicated region
    $region46: #{_forward.1} parent=1 // pred_check
      _
    $region47: #{_forward.1} parent=1 // pred_check_branch
      %676 = sbr.rel (0) target = $region49
    $region48: #{_forward.1} parent=1 // pred_region
      _
    $region49: #{_forward.1} parent=1 // pred_fallthru
      _
    // Predicated region
    $region50: #{_forward.1} parent=1 // pred_check
      _
    $region51: #{_forward.1} parent=1 // pred_check_branch
      %678 = sbr.rel (0) target = $region53
    $region52: #{_forward.1} parent=1 // pred_region
      _
    $region53: #{_forward.1} parent=1 // pred_fallthru
      _
    %679 = vsyncpa [#allocation3], 1
    %680 = vsyncpa [#allocation5], 1
    %681 = vsyncpa [#allocation8], 1

</llo_original>
